<compile_context>
chip_gen: v7x
topology: tpu7x:2x2x1
jax: 0.10.0
libtpu: 0.0.40
codegen_flags: <defaults>
</compile_context>

<pallas_src>
import functools

import jax
import jax.numpy as jnp
from jax import lax
from jax.experimental import pallas as pl
from jax.experimental.pallas import tpu as pltpu

LANE = 128          # vreg lane width (last dim)
SUBLANE = 8         # vreg sublane width (second-to-last dim)
COMPUTE_DTYPE = jnp.bfloat16   # MXU operand dtype; accumulation stays f32


def _round_up(x, m):
    return ((x + m - 1) // m) * m


# -----------------------------------------------------------------------------
# One-time parameter preparation (hoisted out of the per-call forward path)
#   * output-feature (lane) dims zero-padded to multiples of 128
#   * first-layer K dims padded only to a multiple of 8 (sublane), not 128
#   * weights cast to bf16 for the MXU; biases kept in f32
# Zero padding is exact: padded features stay 0 through bias/ReLU/contraction.
# -----------------------------------------------------------------------------
def prepare_deeponet_params(branch_params, trunk_params):
    def prep(params):
        prepared = []
        cur_in = _round_up(params[0][0].shape[0], SUBLANE)
        for (w, b) in params:
            out_pad = _round_up(w.shape[1], LANE)
            w_p = jnp.pad(w, ((0, cur_in - w.shape[0]), (0, out_pad - w.shape[1])))
            b_p = jnp.pad(b, ((0, 0), (0, out_pad - b.shape[1])))
            prepared.append((w_p.astype(COMPUTE_DTYPE), b_p.astype(jnp.float32)))
            cur_in = out_pad
        return prepared

    return prep(branch_params), prep(trunk_params)


# -----------------------------------------------------------------------------
# Kernel bodies
# -----------------------------------------------------------------------------
def _mlp(x_f32, wb_refs, n_layers):
    """Linear(+ReLU) stack: bf16 MXU operands, f32 accumulation / bias / ReLU."""
    x = x_f32
    for j in range(n_layers):
        w = wb_refs[2 * j][...]        # bf16 [K, out_pad]
        b = wb_refs[2 * j + 1][...]    # f32  [1, out_pad]
        x = lax.dot_general(
            x.astype(COMPUTE_DTYPE), w,
            dimension_numbers=(((1,), (0,)), ((), ())),
            preferred_element_type=jnp.float32,
        ) + b
        if j != n_layers - 1:
            x = jnp.maximum(x, jnp.float32(0.0))
    return x


def _branch_kernel(*refs, n_layers):
    """refs = (u0, w0, b0, ..., out).  Tiny, gridless, fully VMEM-resident."""
    u_ref, out_ref = refs[0], refs[-1]
    a = _mlp(u_ref[...].astype(jnp.float32), refs[1:-1], n_layers)
    out_ref[...] = a.astype(out_ref.dtype)          # bf16 branch features


def _trunk_contract_kernel(*refs, n_layers):
    """refs = (branch_feats, grid_tile, w0, b0, ..., out_tile). One N tile."""
    a_ref, g_ref, out_ref = refs[0], refs[1], refs[-1]
    t = _mlp(g_ref[...].astype(jnp.float32), refs[2:-1], n_layers)   # [tile_n, p]
    # einsum('bi,ni->bn'): contract the last dims of both operands.
    # TODO(synk): confirm via pl.lower_as_mlir that this lowers to a
    # transposed-RHS MXU matmul (no per-tile vxpose); restructure to a
    # [p, tile_n] RHS if the XLU ever becomes the binding slot on v5e.
    out = lax.dot_general(
        a_ref[...], t.astype(COMPUTE_DTYPE),
        dimension_numbers=(((1,), (1,)), ((), ())),
        preferred_element_type=jnp.float32,
    )
    out_ref[...] = out.astype(out_ref.dtype)


# -----------------------------------------------------------------------------
# Forward: branch pallas_call (once) + trunk/contraction pallas_call tiled on N
# -----------------------------------------------------------------------------
def deeponet_cp_forward(branch_params_p, trunk_params_p, u0, grid, *, tile_n=512):
    """branch_params_p / trunk_params_p must come from prepare_deeponet_params."""
    out_dtype = u0.dtype
    B, branch_in = u0.shape
    N, trunk_in = grid.shape

    branch_in_pad = branch_params_p[0][0].shape[0]
    trunk_in_pad = trunk_params_p[0][0].shape[0]
    p_pad = branch_params_p[-1][0].shape[1]
    assert trunk_params_p[-1][0].shape[1] == p_pad

    B_pad = _round_up(B, SUBLANE)
    # N tile: multiple of 256 (fills v6e/v7x 2x256^2 MXUs; also 128-aligned, so
    # v5e's 4x128^2 MXUs and lane-dense vst are fine too).
    tile_n = min(tile_n, _round_up(N, 256))
    N_pad = _round_up(N, tile_n)
    n_tiles = N_pad // tile_n

    # Per-call padding is limited to the small activations (params pre-padded).
    u0_p = jnp.pad(u0, ((0, B_pad - B), (0, branch_in_pad - branch_in)))
    grid_p = jnp.pad(grid, ((0, N_pad - N), (0, trunk_in_pad - trunk_in)))

    vmem = pl.BlockSpec(memory_space=pltpu.MemorySpace.VMEM)
    nbytes = lambda x: int(x.size) * jnp.dtype(x.dtype).itemsize

    # ---- 1) branch MLP: computed once, not per N tile --------------------------
    branch_flat = [x for wb in branch_params_p for x in wb]
    branch_flops = 0
    k = branch_in_pad
    for (w, _) in branch_params_p:
        branch_flops += 2 * B_pad * k * w.shape[1]
        k = w.shape[1]
    a = pl.pallas_call(
        functools.partial(_branch_kernel, n_layers=len(branch_params_p)),
        out_shape=jax.ShapeDtypeStruct((B_pad, p_pad), COMPUTE_DTYPE),
        in_specs=[vmem] * (1 + len(branch_flat)),
        out_specs=vmem,
        cost_estimate=pl.CostEstimate(
            flops=int(branch_flops), transcendentals=0,
            bytes_accessed=int(nbytes(u0_p) + sum(nbytes(x) for x in branch_flat)
                              + B_pad * p_pad * 2)),
    )(u0_p, *branch_flat)

    # ---- 2) trunk MLP + contraction, tiled over N -------------------------------
    trunk_flat = [x for wb in trunk_params_p for x in wb]

    in_specs = [
        # branch features: constant index map => VMEM-resident across the grid
        pl.BlockSpec((B_pad, p_pad), lambda i: (0, 0)),
        # query coordinates: streamed tile_n rows at a time, double-buffered
        pl.BlockSpec((tile_n, trunk_in_pad), lambda i: (i, 0),
                     pipeline_mode=pl.Buffered(2)),
    ]
    for (w, b) in trunk_params_p:
        in_specs.append(pl.BlockSpec(w.shape, lambda i: (0, 0)))   # resident weights
        in_specs.append(pl.BlockSpec(b.shape, lambda i: (0, 0)))   # resident biases

    out_specs = pl.BlockSpec((B_pad, tile_n), lambda i: (0, i),
                             pipeline_mode=pl.Buffered(2))   # lane-dense vst

    # Cost estimate: actual MXU work (padded hidden widths ARE real cycles), but
    # no fake 128-wide K padding any more; bytes are dtype-aware.
    trunk_flops = 0
    k = trunk_in_pad
    for (w, _) in trunk_params_p:
        trunk_flops += 2 * N_pad * k * w.shape[1]
        k = w.shape[1]
    trunk_flops += 2 * B_pad * p_pad * N_pad
    trunk_bytes = (nbytes(a) + nbytes(grid_p) + sum(nbytes(x) for x in trunk_flat)
                   + B_pad * N_pad * jnp.dtype(out_dtype).itemsize)

    # VMEM budget: resident weights + branch features + double-buffered streaming
    # blocks + per-tile trunk activations; capped at 48 MiB so it is safe on
    # v7x's 64 MiB physical VMEM while still lifting v5e's 16 MiB scoped default.
    max_width = max(w.shape[1] for (w, _) in trunk_params_p)
    resident = nbytes(a) + sum(nbytes(x) for x in trunk_flat)
    streamed = 2 * (tile_n * trunk_in_pad * 4) + 2 * (B_pad * tile_n * 4)
    act_scratch = 3 * tile_n * max_width * 4
    vmem_limit = int(min(max(4 * (resident + streamed + act_scratch), 16 * 2**20),
                         48 * 2**20))

    out_p = pl.pallas_call(
        functools.partial(_trunk_contract_kernel, n_layers=len(trunk_params_p)),
        out_shape=jax.ShapeDtypeStruct((B_pad, N_pad), out_dtype),
        grid=(n_tiles,),
        in_specs=in_specs,
        out_specs=out_specs,
        compiler_params=pltpu.CompilerParams(
            dimension_semantics=("parallel",),     # shards N tiles across v7x TCs
            vmem_limit_bytes=vmem_limit,
        ),
        cost_estimate=pl.CostEstimate(
            flops=int(trunk_flops), transcendentals=0,
            bytes_accessed=int(trunk_bytes)),
    )(a, grid_p, *trunk_flat)

    return out_p[:B, :N]


# -----------------------------------------------------------------------------
# Parameter init (PyTorch nn.Linear-style: U(-1/sqrt(fan_in), 1/sqrt(fan_in)))
# -----------------------------------------------------------------------------
def init_dense_net(key, layer_sizes, dtype=jnp.float32):
    params = []
    for j in range(len(layer_sizes) - 1):
        fan_in, fan_out = layer_sizes[j], layer_sizes[j + 1]
        key, kw, kb = jax.random.split(key, 3)
        bound = 1.0 / jnp.sqrt(jnp.float32(fan_in))
        w = jax.random.uniform(kw, (fan_in, fan_out), dtype, -bound, bound)
        b = jax.random.uniform(kb, (1, fan_out), dtype, -bound, bound)
        params.append((w, b))
    return params


# -----------------------------------------------------------------------------
# Pure-JAX reference mirroring the kernel numerics (bf16 operands, f32 accum)
# -----------------------------------------------------------------------------
def reference_forward(branch_params, trunk_params, u0, grid):
    def mlp(params, x):
        for j, (w, b) in enumerate(params):
            x = jnp.dot(x.astype(COMPUTE_DTYPE), w.astype(COMPUTE_DTYPE),
                        preferred_element_type=jnp.float32) + b.astype(jnp.float32)
            if j != len(params) - 1:
                x = jnp.maximum(x, 0.0)
        return x

    a = mlp(branch_params, u0)
    t = mlp(trunk_params, grid)
    return jnp.einsum('bi,ni->bn', a.astype(COMPUTE_DTYPE), t.astype(COMPUTE_DTYPE),
                      preferred_element_type=jnp.float32)


# -----------------------------------------------------------------------------
# Main
# -----------------------------------------------------------------------------
if __name__ == "__main__":
    # Small DeepONet config: branch maps sensor values -> p, trunk maps coords -> p.
    branch_layer = [16, 32, 32]   # branch_in=16, hidden=32, p=32
    trunk_layer = [2, 32, 32]     # trunk_in=2 (e.g. (x, t)), hidden=32, p=32
    B, N = 2, 8                   # batch of input functions, number of query points

    key = jax.random.PRNGKey(0)
    k_branch, k_trunk, k_u0, k_grid = jax.random.split(key, 4)

    branch_params = init_dense_net(k_branch, branch_layer)
    trunk_params = init_dense_net(k_trunk, trunk_layer)

    u0 = jax.random.normal(k_u0, (B, branch_layer[0]), jnp.float32)
    grid = jax.random.normal(k_grid, (N, trunk_layer[0]), jnp.float32)

    # One-time parameter prep (padding + bf16 cast) -- OUT of the hot path.
    branch_p, trunk_p = prepare_deeponet_params(branch_params, trunk_params)

    fwd = jax.jit(deeponet_cp_forward)
    out = fwd(branch_p, trunk_p, u0, grid)
    out = jax.block_until_ready(out)

    ref = reference_forward(branch_params, trunk_params, u0, grid)
    assert out.shape == (B, N)
    assert jnp.allclose(out, ref, atol=1e-2, rtol=1e-2), \
        f"max abs err {jnp.max(jnp.abs(out - ref))}"

    print("KERNEL_OK")
</pallas_src>

<mosaic_0001>
module attributes {stable_mosaic.version = 11 : i64} {
  func.func @_branch_kernel(%arg0: memref<8x16xf32, #tpu.memory_space<vmem>>, %arg1: memref<16x128xbf16, #tpu.memory_space<vmem>>, %arg2: memref<1x128xf32, #tpu.memory_space<vmem>>, %arg3: memref<128x128xbf16, #tpu.memory_space<vmem>>, %arg4: memref<1x128xf32, #tpu.memory_space<vmem>>, %arg5: memref<8x128xbf16, #tpu.memory_space<vmem>>) attributes {dimension_semantics = [], scalar_prefetch = 0 : i64, scratch_operands = 0 : i64, tpu.core_type = #tpu.core_type<tc>} {
    %c0 = arith.constant 0 : index
    %c0_0 = arith.constant 0 : index
    %0 = vector.load %arg0[%c0, %c0_0] : memref<8x16xf32, #tpu.memory_space<vmem>>, vector<8x16xf32>
    %c0_1 = arith.constant 0 : index
    %c0_2 = arith.constant 0 : index
    %1 = vector.load %arg1[%c0_1, %c0_2] : memref<16x128xbf16, #tpu.memory_space<vmem>>, vector<16x128xbf16>
    %c0_3 = arith.constant 0 : index
    %c0_4 = arith.constant 0 : index
    %2 = vector.load %arg2[%c0_3, %c0_4] : memref<1x128xf32, #tpu.memory_space<vmem>>, vector<1x128xf32>
    %3 = arith.truncf %0 : vector<8x16xf32> to vector<8x16xbf16>
    %cst = arith.constant dense<0.000000e+00> : vector<8x128xf32>
    %4 = tpu.matmul %3, %1, %cst {dimension_numbers = #tpu.dot_dimension_numbers<[1], [0], [0], [1], [0, 0, 1, 1], [], []>} : vector<8x16xbf16>, vector<16x128xbf16>, vector<8x128xf32> -> vector<8x128xf32>
    %5 = vector.broadcast %2 : vector<1x128xf32> to vector<8x128xf32>
    %6 = arith.addf %4, %5 : vector<8x128xf32>
    %cst_5 = arith.constant 0.000000e+00 : f32
    %7 = vector.broadcast %cst_5 : f32 to vector<8x128xf32>
    %8 = arith.maximumf %6, %7 : vector<8x128xf32>
    %c0_6 = arith.constant 0 : index
    %c0_7 = arith.constant 0 : index
    %9 = vector.load %arg3[%c0_6, %c0_7] : memref<128x128xbf16, #tpu.memory_space<vmem>>, vector<128x128xbf16>
    %c0_8 = arith.constant 0 : index
    %c0_9 = arith.constant 0 : index
    %10 = vector.load %arg4[%c0_8, %c0_9] : memref<1x128xf32, #tpu.memory_space<vmem>>, vector<1x128xf32>
    %11 = arith.truncf %8 : vector<8x128xf32> to vector<8x128xbf16>
    %cst_10 = arith.constant dense<0.000000e+00> : vector<8x128xf32>
    %12 = tpu.matmul %11, %9, %cst_10 {dimension_numbers = #tpu.dot_dimension_numbers<[1], [0], [0], [1], [0, 0, 1, 1], [], []>} : vector<8x128xbf16>, vector<128x128xbf16>, vector<8x128xf32> -> vector<8x128xf32>
    %13 = vector.broadcast %10 : vector<1x128xf32> to vector<8x128xf32>
    %14 = arith.addf %12, %13 : vector<8x128xf32>
    %15 = arith.truncf %14 : vector<8x128xf32> to vector<8x128xbf16>
    %c0_11 = arith.constant 0 : index
    %c0_12 = arith.constant 0 : index
    %16 = vector.load %arg5[%c0_11, %c0_12] : memref<8x128xbf16, #tpu.memory_space<vmem>>, vector<8x128xbf16>
    tpu.vector_store %arg5[%c0_11, %c0_12], %15 {strides = array<i32>} : memref<8x128xbf16, #tpu.memory_space<vmem>>, vector<8x128xbf16>,
    return
  }
}

module attributes {stable_mosaic.version = 11 : i64} {
  func.func @_trunk_contract_kernel(%arg0: i32, %arg1: memref<8x128xbf16, #tpu.memory_space<vmem>>, %arg2: memref<256x8xf32, #tpu.memory_space<vmem>>, %arg3: memref<8x128xbf16, #tpu.memory_space<vmem>>, %arg4: memref<1x128xf32, #tpu.memory_space<vmem>>, %arg5: memref<128x128xbf16, #tpu.memory_space<vmem>>, %arg6: memref<1x128xf32, #tpu.memory_space<vmem>>, %arg7: memref<8x256xf32, #tpu.memory_space<vmem>>) attributes {dimension_semantics = [#tpu.dimension_semantics<parallel>], iteration_bounds = array<i64: 1>, scalar_prefetch = 0 : i64, scratch_operands = 0 : i64, tpu.core_type = #tpu.core_type<tc>, window_params = [{pipeline_mode = #tpu.pipeline_mode<synchronous>, transform_indices = @transform_0, window_bounds = array<i64: 8, 128>}, {pipeline_mode = #tpu.pipeline_mode<double_buffered>, transform_indices = @transform_1, window_bounds = array<i64: 256, 8>}, {pipeline_mode = #tpu.pipeline_mode<synchronous>, transform_indices = @transform_2, window_bounds = array<i64: 8, 128>}, {pipeline_mode = #tpu.pipeline_mode<synchronous>, transform_indices = @transform_3, window_bounds = array<i64: 1, 128>}, {pipeline_mode = #tpu.pipeline_mode<synchronous>, transform_indices = @transform_4, window_bounds = array<i64: 128, 128>}, {pipeline_mode = #tpu.pipeline_mode<synchronous>, transform_indices = @transform_5, window_bounds = array<i64: 1, 128>}, {pipeline_mode = #tpu.pipeline_mode<double_buffered>, transform_indices = @transform_6, window_bounds = array<i64: 8, 256>}]} {
    %c0 = arith.constant 0 : index
    %c0_0 = arith.constant 0 : index
    %0 = vector.load %arg2[%c0, %c0_0] : memref<256x8xf32, #tpu.memory_space<vmem>>, vector<256x8xf32>
    %c0_1 = arith.constant 0 : index
    %c0_2 = arith.constant 0 : index
    %1 = vector.load %arg3[%c0_1, %c0_2] : memref<8x128xbf16, #tpu.memory_space<vmem>>, vector<8x128xbf16>
    %c0_3 = arith.constant 0 : index
    %c0_4 = arith.constant 0 : index
    %2 = vector.load %arg4[%c0_3, %c0_4] : memref<1x128xf32, #tpu.memory_space<vmem>>, vector<1x128xf32>
    %3 = arith.truncf %0 : vector<256x8xf32> to vector<256x8xbf16>
    %cst = arith.constant dense<0.000000e+00> : vector<256x128xf32>
    %4 = tpu.matmul %3, %1, %cst {dimension_numbers = #tpu.dot_dimension_numbers<[1], [0], [0], [1], [0, 0, 1, 1], [], []>} : vector<256x8xbf16>, vector<8x128xbf16>, vector<256x128xf32> -> vector<256x128xf32>
    %5 = vector.broadcast %2 : vector<1x128xf32> to vector<256x128xf32>
    %6 = arith.addf %4, %5 : vector<256x128xf32>
    %cst_5 = arith.constant 0.000000e+00 : f32
    %7 = vector.broadcast %cst_5 : f32 to vector<256x128xf32>
    %8 = arith.maximumf %6, %7 : vector<256x128xf32>
    %c0_6 = arith.constant 0 : index
    %c0_7 = arith.constant 0 : index
    %9 = vector.load %arg5[%c0_6, %c0_7] : memref<128x128xbf16, #tpu.memory_space<vmem>>, vector<128x128xbf16>
    %c0_8 = arith.constant 0 : index
    %c0_9 = arith.constant 0 : index
    %10 = vector.load %arg6[%c0_8, %c0_9] : memref<1x128xf32, #tpu.memory_space<vmem>>, vector<1x128xf32>
    %11 = arith.truncf %8 : vector<256x128xf32> to vector<256x128xbf16>
    %cst_10 = arith.constant dense<0.000000e+00> : vector<256x128xf32>
    %12 = tpu.matmul %11, %9, %cst_10 {dimension_numbers = #tpu.dot_dimension_numbers<[1], [0], [0], [1], [0, 0, 1, 1], [], []>} : vector<256x128xbf16>, vector<128x128xbf16>, vector<256x128xf32> -> vector<256x128xf32>
    %13 = vector.broadcast %10 : vector<1x128xf32> to vector<256x128xf32>
    %14 = arith.addf %12, %13 : vector<256x128xf32>
    %c0_11 = arith.constant 0 : index
    %c0_12 = arith.constant 0 : index
    %15 = vector.load %arg1[%c0_11, %c0_12] : memref<8x128xbf16, #tpu.memory_space<vmem>>, vector<8x128xbf16>
    %16 = arith.truncf %14 : vector<256x128xf32> to vector<256x128xbf16>
    %cst_13 = arith.constant dense<0.000000e+00> : vector<8x256xf32>
    %17 = tpu.matmul %15, %16, %cst_13 {dimension_numbers = #tpu.dot_dimension_numbers<[1], [1], [0], [0], [0, 0, 1, 0], [], []>} : vector<8x128xbf16>, vector<256x128xbf16>, vector<8x256xf32> -> vector<8x256xf32>
    %c0_14 = arith.constant 0 : index
    %c0_15 = arith.constant 0 : index
    %18 = vector.load %arg7[%c0_14, %c0_15] : memref<8x256xf32, #tpu.memory_space<vmem>>, vector<8x256xf32>
    tpu.vector_store %arg7[%c0_14, %c0_15], %17 {strides = array<i32>} : memref<8x256xf32, #tpu.memory_space<vmem>>, vector<8x256xf32>,
    return
  }
  func.func @transform_0(%arg0: i32) -> (i32, i32) {
    %c0_i32 = arith.constant 0 : i32
    %c0_i32_0 = arith.constant 0 : i32
    %c0_i32_1 = arith.constant 0 : i32
    return %c0_i32, %c0_i32_0 : i32, i32
  }
  func.func @transform_1(%arg0: i32) -> (i32, i32) {
    %c0_i32 = arith.constant 0 : i32
    %c0_i32_0 = arith.constant 0 : i32
    return %arg0, %c0_i32 : i32, i32
  }
  func.func @transform_2(%arg0: i32) -> (i32, i32) {
    %c0_i32 = arith.constant 0 : i32
    %c0_i32_0 = arith.constant 0 : i32
    %c0_i32_1 = arith.constant 0 : i32
    return %c0_i32, %c0_i32_0 : i32, i32
  }
  func.func @transform_3(%arg0: i32) -> (i32, i32) {
    %c0_i32 = arith.constant 0 : i32
    %c0_i32_0 = arith.constant 0 : i32
    %c0_i32_1 = arith.constant 0 : i32
    return %c0_i32, %c0_i32_0 : i32, i32
  }
  func.func @transform_4(%arg0: i32) -> (i32, i32) {
    %c0_i32 = arith.constant 0 : i32
    %c0_i32_0 = arith.constant 0 : i32
    %c0_i32_1 = arith.constant 0 : i32
    return %c0_i32, %c0_i32_0 : i32, i32
  }
  func.func @transform_5(%arg0: i32) -> (i32, i32) {
    %c0_i32 = arith.constant 0 : i32
    %c0_i32_0 = arith.constant 0 : i32
    %c0_i32_1 = arith.constant 0 : i32
    return %c0_i32, %c0_i32_0 : i32, i32
  }
  func.func @transform_6(%arg0: i32) -> (i32, i32) {
    %c0_i32 = arith.constant 0 : i32
    %c0_i32_0 = arith.constant 0 : i32
    return %c0_i32, %arg0 : i32, i32
  }
}

</mosaic_0001>

<llo_original>
// kernel: deeponet_cp_forward.2
$region0: #{deeponet_cp_forward.2}
  #allocation0 [shape = 'u32[]', space=smem, size = 0x4, offset = 0x4, fixed_abs, tag = 'smem constant byte address 0x4 - core index']
  #allocation1 [shape = 'u32[144,128]{1,0:T(1,128)}', space=vmem, size = 0x12000, scoped, tag = 'internal scratch']
  %s0 = inlined_call_operand.vmem [shape: f32[8,16], index: 0, kind: input, shape index: {}]
  %s1 = inlined_call_operand.vmem [shape: bf16[16,128], index: 1, kind: input, shape index: {}]
  %s2 = inlined_call_operand.vmem [shape: f32[1,128], index: 2, kind: input, shape index: {}]
  %s3 = inlined_call_operand.hbm [shape: bf16[128,128], index: 3, kind: input, shape index: {}]
  %s4 = inlined_call_operand.vmem [shape: f32[1,128], index: 4, kind: input, shape index: {}]
  %s5 = inlined_call_operand.vmem [shape: bf16[8,128], index: 5, kind: output, shape index: {}]
  %s6 = sld [smem:[#allocation0]]
  $region34: #{deeponet_cp_forward.2} parent=0
    _
  %s8 = ssub.s32 1, %s6
  %s9 = scalar_select 0, %s8, %s6
  $region1: #{deeponet_cp_forward.2} parent=0
    #allocation2 [shape = 'u8[32768]{0}', space=vmem, size = 0x8000, scoped, tag = 'input window, operand 3, single buffered']
    #allocation3 [shape = 's32[1]{0}', space=sflag, size = 0x4, scoped, tag = 'scoped memory for deeponet_cp_forward.2']
    %10 = vsyncpa [#allocation3], 0
    // Predicated region
    $region2: #{deeponet_cp_forward.2} parent=1 // pred_check
      _
    $region3: #{deeponet_cp_forward.2} parent=1 // pred_check_branch
      %12 = sbr.rel (0) target = $region5
    $region4: #{deeponet_cp_forward.2} parent=1 // pred_region
      _
    $region5: #{deeponet_cp_forward.2} parent=1 // pred_fallthru
      _
    // Predicated region
    $region6: #{deeponet_cp_forward.2} parent=1 // pred_check
      _
    $region7: #{deeponet_cp_forward.2} parent=1 // pred_check_branch
      %14 = sbr.rel (0) target = $region9
    $region8: #{deeponet_cp_forward.2} parent=1 // pred_region
      _
    $region9: #{deeponet_cp_forward.2} parent=1 // pred_fallthru
      _
    // Predicated region
    $region10: #{deeponet_cp_forward.2} parent=1 // pred_check
      _
    $region11: #{deeponet_cp_forward.2} parent=1 // pred_check_branch
      %16 = sbr.rel (0) target = $region13
    $region12: #{deeponet_cp_forward.2} parent=1 // pred_region
      _
    $region13: #{deeponet_cp_forward.2} parent=1 // pred_fallthru
      _
    // Predicated region
    $region14: #{deeponet_cp_forward.2} parent=1 // pred_check
      _
    $region15: #{deeponet_cp_forward.2} parent=1 // pred_check_branch
      %18 = sbr.rel (0) target = $region17
    $region16: #{deeponet_cp_forward.2} parent=1 // pred_region
      %s20 = ssub.s32 1024, 1024
      %21 = vsyncadd [#allocation3], %s20
      %s22 = sshll.u32 [#allocation2], 4
      %s23 = int_to_ptr.vmem [resolvable:$true] %s22
      %28 = dma.hbm_to_vmem [thread:$0]  %s3, 1024, %s23, [#allocation3], 64, 64, 4
    $region17: #{deeponet_cp_forward.2} parent=1 // pred_fallthru
      _
    // Predicated region
    $region18: #{deeponet_cp_forward.2} parent=1 // pred_check
      _
    $region19: #{deeponet_cp_forward.2} parent=1 // pred_check_branch
      %30 = sbr.rel (0) target = $region21
    $region20: #{deeponet_cp_forward.2} parent=1 // pred_region
      _
    $region21: #{deeponet_cp_forward.2} parent=1 // pred_fallthru
      _
    // Predicated region
    $region22: #{deeponet_cp_forward.2} parent=1 // pred_check
      _
    $region23: #{deeponet_cp_forward.2} parent=1 // pred_check_branch
      %32 = sbr.rel (0) target = $region25
    $region24: #{deeponet_cp_forward.2} parent=1 // pred_region
      %33 = dma.done [#allocation3], 1024
    $region25: #{deeponet_cp_forward.2} parent=1 // pred_fallthru
      _
    %v35 = vld [vmem:[%s0] sm:$0xff]
    %v36 = vld [vmem:[%s1] sm:$0xf]
    %v37 = vld [vmem:[%s1 + $0x4] sm:$0xf]
    %v38 = vld [vmem:[%s2] sm:$0x1]
    %v39 = vpack.c.bf16 %v35, %v35
    %v41 = vlaneseq
    %v42 = vshrl.u32 %v41, 7
    %v43 = vsub.s32 0, %v42
    %v44 = vrot.slane %v38, %v43
    %v48 = vunpack.c.l.b16 %v36
    %v49 = vunpack.c.l.b16 %v37
    %v50 = vpack.c.b16 %v49, %v48
    %vm52 = vcmask 130048
    %v54 = vsel %vm52, %v39, 0
    %56 = vmatprep.subr.bf16.mxu0 0
    %57 = vmatpush1.bf16.msra.mxu0 %v50
    %58 = vmatprep.subr.bf16.mxu0 0
    %59 = vmatpush1.bf16.msra.mxu0 0
    %60 = vmatprep.subr.bf16.mxu0 0
    %61 = vmatpush1.bf16.msra.mxu0 0
    %62 = vmatprep.subr.bf16.mxu0 0
    %63 = vmatpush1.bf16.msra.mxu0 0
    %64 = vmatprep.subr.bf16.mxu0 0
    %65 = vmatpush1.bf16.msra.mxu0 0
    %66 = vmatprep.subr.bf16.mxu0 0
    %67 = vmatpush1.bf16.msra.mxu0 0
    %68 = vmatprep.subr.bf16.mxu0 0
    %69 = vmatpush1.bf16.msra.mxu0 0
    %70 = vmatprep.subr.bf16.mxu0 0
    %71 = vmatpush1.bf16.msra.mxu0 0
    %72 = vmatprep.subr.bf16.mxu0 0
    %73 = vmatpush1.bf16.msra.mxu0 0
    %74 = vmatprep.subr.bf16.mxu0 0
    %75 = vmatpush1.bf16.msra.mxu0 0
    %76 = vmatprep.subr.bf16.mxu0 0
    %77 = vmatpush1.bf16.msra.mxu0 0
    %78 = vmatprep.subr.bf16.mxu0 0
    %79 = vmatpush1.bf16.msra.mxu0 0
    %80 = vmatprep.subr.bf16.mxu0 0
    %81 = vmatpush1.bf16.msra.mxu0 0
    %82 = vmatprep.subr.bf16.mxu0 0
    %83 = vmatpush1.bf16.msra.mxu0 0
    %84 = vmatprep.subr.bf16.mxu0 0
    %85 = vmatpush1.bf16.msra.mxu0 0
    %86 = vmatprep.subr.bf16.mxu0 0
    %87 = vmatpush1.bf16.msra.mxu0 0
    %88 = vmatprep.mubr.bf16.mxu0 0
    %89 = vmatmul.mubr.bf16.gmra.mrb[0].mxu0 %v54
    %v90 = vpop.f32.mrb[0].mxu0
    %v91 = vadd.f32 %v44, %v90
    %v92 = vpop.f32.mrb[0].mxu0
    %v93 = vpop.f32.mrb[0].mxu0
    %v94 = vpop.f32.mrb[0].mxu0
    %95 = vdwg.mxu0
    %v96 = vmax.f32 %v91, 0.0
    %v97 = vld [vmem:[#allocation2] sm:$0xf]
    %v98 = vld [vmem:[#allocation2 + $0x4] sm:$0xf]
    %v99 = vld [vmem:[#allocation2 + $0x8] sm:$0xf]
    %v100 = vld [vmem:[#allocation2 + $0xc] sm:$0xf]
    %v101 = vld [vmem:[#allocation2 + $0x10] sm:$0xf]
    %v102 = vld [vmem:[#allocation2 + $0x14] sm:$0xf]
    %v103 = vld [vmem:[#allocation2 + $0x18] sm:$0xf]
    %v104 = vld [vmem:[#allocation2 + $0x1c] sm:$0xf]
    %v105 = vld [vmem:[#allocation2 + $0x20] sm:$0xf]
    %v106 = vld [vmem:[#allocation2 + $0x24] sm:$0xf]
    %v107 = vld [vmem:[#allocation2 + $0x28] sm:$0xf]
    %v108 = vld [vmem:[#allocation2 + $0x2c] sm:$0xf]
    %v109 = vld [vmem:[#allocation2 + $0x30] sm:$0xf]
    %v110 = vld [vmem:[#allocation2 + $0x34] sm:$0xf]
    %v111 = vld [vmem:[#allocation2 + $0x38] sm:$0xf]
    %v112 = vld [vmem:[#allocation2 + $0x3c] sm:$0xf]
    %v113 = vld [vmem:[%s4] sm:$0x1]
    %v114 = vpack.c.bf16 %v96, %v96
    %v116 = vlaneseq
    %v117 = vshrl.u32 %v116, 7
    %v118 = vsub.s32 0, %v117
    %v119 = vrot.slane %v113, %v118
    %v137 = vunpack.c.l.b16 %v97
    %v138 = vunpack.c.l.b16 %v98
    %v139 = vunpack.c.l.b16 %v99
    %v140 = vunpack.c.l.b16 %v100
    %v141 = vunpack.c.l.b16 %v101
    %v142 = vunpack.c.l.b16 %v102
    %v143 = vunpack.c.l.b16 %v103
    %v144 = vunpack.c.l.b16 %v104
    %v145 = vunpack.c.l.b16 %v105
    %v146 = vunpack.c.l.b16 %v106
    %v147 = vunpack.c.l.b16 %v107
    %v148 = vunpack.c.l.b16 %v108
    %v149 = vunpack.c.l.b16 %v109
    %v150 = vunpack.c.l.b16 %v110
    %v151 = vunpack.c.l.b16 %v111
    %v152 = vunpack.c.l.b16 %v112
    %v153 = vpack.c.b16 %v138, %v137
    %v154 = vpack.c.b16 %v140, %v139
    %v155 = vpack.c.b16 %v142, %v141
    %v156 = vpack.c.b16 %v144, %v143
    %v157 = vpack.c.b16 %v146, %v145
    %v158 = vpack.c.b16 %v148, %v147
    %v159 = vpack.c.b16 %v150, %v149
    %v160 = vpack.c.b16 %v152, %v151
    %169 = vmatprep.subr.bf16.mxu0 0
    %170 = vmatpush1.bf16.msra.mxu0 %v153
    %171 = vmatprep.subr.bf16.mxu0 0
    %172 = vmatpush1.bf16.msra.mxu0 %v154
    %173 = vmatprep.subr.bf16.mxu0 0
    %174 = vmatpush1.bf16.msra.mxu0 %v155
    %175 = vmatprep.subr.bf16.mxu0 0
    %176 = vmatpush1.bf16.msra.mxu0 %v156
    %177 = vmatprep.subr.bf16.mxu0 0
    %178 = vmatpush1.bf16.msra.mxu0 %v157
    %179 = vmatprep.subr.bf16.mxu0 0
    %180 = vmatpush1.bf16.msra.mxu0 %v158
    %181 = vmatprep.subr.bf16.mxu0 0
    %182 = vmatpush1.bf16.msra.mxu0 %v159
    %183 = vmatprep.subr.bf16.mxu0 0
    %184 = vmatpush1.bf16.msra.mxu0 %v160
    %185 = vmatprep.subr.bf16.mxu0 0
    %186 = vmatpush1.bf16.msra.mxu0 0
    %187 = vmatprep.subr.bf16.mxu0 0
    %188 = vmatpush1.bf16.msra.mxu0 0
    %189 = vmatprep.subr.bf16.mxu0 0
    %190 = vmatpush1.bf16.msra.mxu0 0
    %191 = vmatprep.subr.bf16.mxu0 0
    %192 = vmatpush1.bf16.msra.mxu0 0
    %193 = vmatprep.subr.bf16.mxu0 0
    %194 = vmatpush1.bf16.msra.mxu0 0
    %195 = vmatprep.subr.bf16.mxu0 0
    %196 = vmatpush1.bf16.msra.mxu0 0
    %197 = vmatprep.subr.bf16.mxu0 0
    %198 = vmatpush1.bf16.msra.mxu0 0
    %199 = vmatprep.subr.bf16.mxu0 0
    %200 = vmatpush1.bf16.msra.mxu0 0
    %201 = vmatprep.mubr.bf16.mxu0 0
    %202 = vmatmul.mubr.bf16.gmra.mrb[0].mxu0 %v114
    %v203 = vpop.f32.mrb[0].mxu0
    %v204 = vadd.f32 %v119, %v203
    %v205 = vpop.f32.mrb[0].mxu0
    %v206 = vpop.f32.mrb[0].mxu0
    %v207 = vpop.f32.mrb[0].mxu0
    %208 = vdwg.mxu0
    %v209 = vpack.c.bf16 %v204, %v204
    %210 = vst [vmem:[%s5] sm:$0xf] %v209
    // Predicated region
    $region26: #{deeponet_cp_forward.2} parent=1 // pred_check
      _
    $region27: #{deeponet_cp_forward.2} parent=1 // pred_check_branch
      %212 = sbr.rel (0) target = $region29
    $region28: #{deeponet_cp_forward.2} parent=1 // pred_region
      _
    $region29: #{deeponet_cp_forward.2} parent=1 // pred_fallthru
      _
    // Predicated region
    $region30: #{deeponet_cp_forward.2} parent=1 // pred_check
      _
    $region31: #{deeponet_cp_forward.2} parent=1 // pred_check_branch
      %214 = sbr.rel (0) target = $region33
    $region32: #{deeponet_cp_forward.2} parent=1 // pred_region
      _
    $region33: #{deeponet_cp_forward.2} parent=1 // pred_fallthru
      _
    %215 = vsyncpa [#allocation3], 1

// kernel: deeponet_cp_forward.3
$region0: #{deeponet_cp_forward.3}
  #allocation0 [shape = 'u32[]', space=smem, size = 0x4, offset = 0x4, fixed_abs, tag = 'smem constant byte address 0x4 - core index']
  #allocation1 [shape = 'u32[144,128]{1,0:T(1,128)}', space=vmem, size = 0x12000, scoped, tag = 'internal scratch']
  %s0 = inlined_call_operand.vmem [shape: bf16[8,128], index: 0, kind: input, shape index: {}]
  %s1 = inlined_call_operand.vmem [shape: f32[256,8], index: 1, kind: input, shape index: {}]
  %s2 = inlined_call_operand.vmem [shape: bf16[8,128], index: 2, kind: input, shape index: {}]
  %s3 = inlined_call_operand.vmem [shape: f32[1,128], index: 3, kind: input, shape index: {}]
  %s4 = inlined_call_operand.vmem [shape: bf16[128,128], index: 4, kind: input, shape index: {}]
  %s5 = inlined_call_operand.vmem [shape: f32[1,128], index: 5, kind: input, shape index: {}]
  %s6 = inlined_call_operand.vmem [shape: f32[8,256], index: 6, kind: output, shape index: {}]
  %s7 = sld [smem:[#allocation0]]
  $region34: #{deeponet_cp_forward.3} parent=0
    _
  %s9 = ssub.s32 1, %s7
  %s10 = scalar_select 0, %s9, %s7
  // Predicated region
  $region2: #{deeponet_cp_forward.3} parent=0 // pred_check
    _
  $region3: #{deeponet_cp_forward.3} parent=0 // pred_check_branch
    %12 = sbr.rel (0) target = $region5
  $region4: #{deeponet_cp_forward.3} parent=0 // pred_region
    _
  $region5: #{deeponet_cp_forward.3} parent=0 // pred_fallthru
    _
  // Predicated region
  $region6: #{deeponet_cp_forward.3} parent=0 // pred_check
    _
  $region7: #{deeponet_cp_forward.3} parent=0 // pred_check_branch
    %14 = sbr.rel (0) target = $region9
  $region8: #{deeponet_cp_forward.3} parent=0 // pred_region
    _
  $region9: #{deeponet_cp_forward.3} parent=0 // pred_fallthru
    _
  // Predicated region
  $region10: #{deeponet_cp_forward.3} parent=0 // pred_check
    _
  $region11: #{deeponet_cp_forward.3} parent=0 // pred_check_branch
    %16 = sbr.rel (0) target = $region13
  $region12: #{deeponet_cp_forward.3} parent=0 // pred_region
    _
  $region13: #{deeponet_cp_forward.3} parent=0 // pred_fallthru
    _
  // Predicated region
  $region14: #{deeponet_cp_forward.3} parent=0 // pred_check
    _
  $region15: #{deeponet_cp_forward.3} parent=0 // pred_check_branch
    %18 = sbr.rel (0) target = $region17
  $region16: #{deeponet_cp_forward.3} parent=0 // pred_region
    _
  $region17: #{deeponet_cp_forward.3} parent=0 // pred_fallthru
    _
  // Predicated region
  $region18: #{deeponet_cp_forward.3} parent=0 // pred_check
    _
  $region19: #{deeponet_cp_forward.3} parent=0 // pred_check_branch
    %20 = sbr.rel (0) target = $region21
  $region20: #{deeponet_cp_forward.3} parent=0 // pred_region
    _
  $region21: #{deeponet_cp_forward.3} parent=0 // pred_fallthru
    _
  // Predicated region
  $region22: #{deeponet_cp_forward.3} parent=0 // pred_check
    _
  $region23: #{deeponet_cp_forward.3} parent=0 // pred_check_branch
    %22 = sbr.rel (0) target = $region25
  $region24: #{deeponet_cp_forward.3} parent=0 // pred_region
    _
  $region25: #{deeponet_cp_forward.3} parent=0 // pred_fallthru
    _
  %v24 = vld [vmem:[%s1] sm:$0xff]
  %v25 = vld [vmem:[%s1 + $0x8] sm:$0xff]
  %v26 = vld [vmem:[%s1 + $0x10] sm:$0xff]
  %v27 = vld [vmem:[%s1 + $0x18] sm:$0xff]
  %v28 = vld [vmem:[%s1 + $0x20] sm:$0xff]
  %v29 = vld [vmem:[%s1 + $0x28] sm:$0xff]
  %v30 = vld [vmem:[%s1 + $0x30] sm:$0xff]
  %v31 = vld [vmem:[%s1 + $0x38] sm:$0xff]
  %v32 = vld [vmem:[%s1 + $0x40] sm:$0xff]
  %v33 = vld [vmem:[%s1 + $0x48] sm:$0xff]
  %v34 = vld [vmem:[%s1 + $0x50] sm:$0xff]
  %v35 = vld [vmem:[%s1 + $0x58] sm:$0xff]
  %v36 = vld [vmem:[%s1 + $0x60] sm:$0xff]
  %v37 = vld [vmem:[%s1 + $0x68] sm:$0xff]
  %v38 = vld [vmem:[%s1 + $0x70] sm:$0xff]
  %v39 = vld [vmem:[%s1 + $0x78] sm:$0xff]
  %v40 = vld [vmem:[%s1 + $0x80] sm:$0xff]
  %v41 = vld [vmem:[%s1 + $0x88] sm:$0xff]
  %v42 = vld [vmem:[%s1 + $0x90] sm:$0xff]
  %v43 = vld [vmem:[%s1 + $0x98] sm:$0xff]
  %v44 = vld [vmem:[%s1 + $0xa0] sm:$0xff]
  %v45 = vld [vmem:[%s1 + $0xa8] sm:$0xff]
  %v46 = vld [vmem:[%s1 + $0xb0] sm:$0xff]
  %v47 = vld [vmem:[%s1 + $0xb8] sm:$0xff]
  %v48 = vld [vmem:[%s1 + $0xc0] sm:$0xff]
  %v49 = vld [vmem:[%s1 + $0xc8] sm:$0xff]
  %v50 = vld [vmem:[%s1 + $0xd0] sm:$0xff]
  %v51 = vld [vmem:[%s1 + $0xd8] sm:$0xff]
  %v52 = vld [vmem:[%s1 + $0xe0] sm:$0xff]
  %v53 = vld [vmem:[%s1 + $0xe8] sm:$0xff]
  %v54 = vld [vmem:[%s1 + $0xf0] sm:$0xff]
  %v55 = vld [vmem:[%s1 + $0xf8] sm:$0xff]
  %v56 = vld [vmem:[%s2] sm:$0xf]
  %v57 = vld [vmem:[%s3] sm:$0x1]
  %v58 = vpack.c.bf16 %v25, %v24
  %v59 = vpack.c.bf16 %v27, %v26
  %v60 = vpack.c.bf16 %v29, %v28
  %v61 = vpack.c.bf16 %v31, %v30
  %v62 = vpack.c.bf16 %v33, %v32
  %v63 = vpack.c.bf16 %v35, %v34
  %v64 = vpack.c.bf16 %v37, %v36
  %v65 = vpack.c.bf16 %v39, %v38
  %v66 = vpack.c.bf16 %v41, %v40
  %v67 = vpack.c.bf16 %v43, %v42
  %v68 = vpack.c.bf16 %v45, %v44
  %v69 = vpack.c.bf16 %v47, %v46
  %v70 = vpack.c.bf16 %v49, %v48
  %v71 = vpack.c.bf16 %v51, %v50
  %v72 = vpack.c.bf16 %v53, %v52
  %v73 = vpack.c.bf16 %v55, %v54
  %v75 = vlaneseq
  %v76 = vshrl.u32 %v75, 7
  %v77 = vsub.s32 0, %v76
  %v78 = vrot.slane %v57, %v77
  %vm80 = vcmask 64512
  %v82 = vsel %vm80, %v58, 0
  %v85 = vsel %vm80, %v59, 0
  %v88 = vsel %vm80, %v60, 0
  %v91 = vsel %vm80, %v61, 0
  %v94 = vsel %vm80, %v62, 0
  %v97 = vsel %vm80, %v63, 0
  %v100 = vsel %vm80, %v64, 0
  %v103 = vsel %vm80, %v65, 0
  %v106 = vsel %vm80, %v66, 0
  %v109 = vsel %vm80, %v67, 0
  %v112 = vsel %vm80, %v68, 0
  %v115 = vsel %vm80, %v69, 0
  %v118 = vsel %vm80, %v70, 0
  %v121 = vsel %vm80, %v71, 0
  %v124 = vsel %vm80, %v72, 0
  %v127 = vsel %vm80, %v73, 0
  %vm129 = vcmask 1043456
  %v131 = vsel %vm129, %v56, 0
  %133 = vmatprep.subr.bf16.mxu0 0
  %134 = vmatpush1.bf16.msra.mxu0 %v131
  %135 = vmatprep.subr.bf16.mxu0 0
  %136 = vmatpush1.bf16.msra.mxu0 0
  %137 = vmatprep.subr.bf16.mxu0 0
  %138 = vmatpush1.bf16.msra.mxu0 0
  %139 = vmatprep.subr.bf16.mxu0 0
  %140 = vmatpush1.bf16.msra.mxu0 0
  %141 = vmatprep.subr.bf16.mxu0 0
  %142 = vmatpush1.bf16.msra.mxu0 0
  %143 = vmatprep.subr.bf16.mxu0 0
  %144 = vmatpush1.bf16.msra.mxu0 0
  %145 = vmatprep.subr.bf16.mxu0 0
  %146 = vmatpush1.bf16.msra.mxu0 0
  %147 = vmatprep.subr.bf16.mxu0 0
  %148 = vmatpush1.bf16.msra.mxu0 0
  %149 = vmatprep.subr.bf16.mxu0 0
  %150 = vmatpush1.bf16.msra.mxu0 0
  %151 = vmatprep.subr.bf16.mxu0 0
  %152 = vmatpush1.bf16.msra.mxu0 0
  %153 = vmatprep.subr.bf16.mxu0 0
  %154 = vmatpush1.bf16.msra.mxu0 0
  %155 = vmatprep.subr.bf16.mxu0 0
  %156 = vmatpush1.bf16.msra.mxu0 0
  %157 = vmatprep.subr.bf16.mxu0 0
  %158 = vmatpush1.bf16.msra.mxu0 0
  %159 = vmatprep.subr.bf16.mxu0 0
  %160 = vmatpush1.bf16.msra.mxu0 0
  %161 = vmatprep.subr.bf16.mxu0 0
  %162 = vmatpush1.bf16.msra.mxu0 0
  %163 = vmatprep.subr.bf16.mxu0 0
  %164 = vmatpush1.bf16.msra.mxu0 0
  %165 = vmatprep.mubr.bf16.mxu0 0
  %166 = vmatmul.mubr.bf16.gmra.mrb[0].mxu0 %v82
  %v167 = vpop.f32.mrb[0].mxu0
  %v168 = vadd.f32 %v78, %v167
  %v169 = vpop.f32.mrb[0].mxu0
  %v170 = vpop.f32.mrb[0].mxu0
  %v171 = vadd.f32 %v78, %v170
  %v172 = vpop.f32.mrb[0].mxu0
  %173 = vmatprep.mubr.bf16.mxu0 0
  %174 = vmatmul.mubr.bf16.gmra.mrb[0].mxu0 %v85
  %v175 = vpop.f32.mrb[0].mxu0
  %v176 = vadd.f32 %v78, %v175
  %v177 = vpop.f32.mrb[0].mxu0
  %v178 = vpop.f32.mrb[0].mxu0
  %v179 = vadd.f32 %v78, %v178
  %v180 = vpop.f32.mrb[0].mxu0
  %181 = vmatprep.mubr.bf16.mxu0 0
  %182 = vmatmul.mubr.bf16.gmra.mrb[0].mxu0 %v88
  %v183 = vpop.f32.mrb[0].mxu0
  %v184 = vadd.f32 %v78, %v183
  %v185 = vpop.f32.mrb[0].mxu0
  %v186 = vpop.f32.mrb[0].mxu0
  %v187 = vadd.f32 %v78, %v186
  %v188 = vpop.f32.mrb[0].mxu0
  %189 = vmatprep.mubr.bf16.mxu0 0
  %190 = vmatmul.mubr.bf16.gmra.mrb[0].mxu0 %v91
  %v191 = vpop.f32.mrb[0].mxu0
  %v192 = vadd.f32 %v78, %v191
  %v193 = vpop.f32.mrb[0].mxu0
  %v194 = vpop.f32.mrb[0].mxu0
  %v195 = vadd.f32 %v78, %v194
  %v196 = vpop.f32.mrb[0].mxu0
  %197 = vmatprep.mubr.bf16.mxu0 0
  %198 = vmatmul.mubr.bf16.gmra.mrb[0].mxu0 %v94
  %v199 = vpop.f32.mrb[0].mxu0
  %v200 = vadd.f32 %v78, %v199
  %v201 = vpop.f32.mrb[0].mxu0
  %v202 = vpop.f32.mrb[0].mxu0
  %v203 = vadd.f32 %v78, %v202
  %v204 = vpop.f32.mrb[0].mxu0
  %205 = vmatprep.mubr.bf16.mxu0 0
  %206 = vmatmul.mubr.bf16.gmra.mrb[0].mxu0 %v97
  %v207 = vpop.f32.mrb[0].mxu0
  %v208 = vadd.f32 %v78, %v207
  %v209 = vpop.f32.mrb[0].mxu0
  %v210 = vpop.f32.mrb[0].mxu0
  %v211 = vadd.f32 %v78, %v210
  %v212 = vpop.f32.mrb[0].mxu0
  %213 = vmatprep.mubr.bf16.mxu0 0
  %214 = vmatmul.mubr.bf16.gmra.mrb[0].mxu0 %v100
  %v215 = vpop.f32.mrb[0].mxu0
  %v216 = vadd.f32 %v78, %v215
  %v217 = vpop.f32.mrb[0].mxu0
  %v218 = vpop.f32.mrb[0].mxu0
  %v219 = vadd.f32 %v78, %v218
  %v220 = vpop.f32.mrb[0].mxu0
  %221 = vmatprep.mubr.bf16.mxu0 0
  %222 = vmatmul.mubr.bf16.gmra.mrb[0].mxu0 %v103
  %v223 = vpop.f32.mrb[0].mxu0
  %v224 = vadd.f32 %v78, %v223
  %v225 = vpop.f32.mrb[0].mxu0
  %v226 = vpop.f32.mrb[0].mxu0
  %v227 = vadd.f32 %v78, %v226
  %v228 = vpop.f32.mrb[0].mxu0
  %229 = vmatprep.mubr.bf16.mxu0 0
  %230 = vmatmul.mubr.bf16.gmra.mrb[0].mxu0 %v106
  %v231 = vpop.f32.mrb[0].mxu0
  %v232 = vadd.f32 %v78, %v231
  %v233 = vpop.f32.mrb[0].mxu0
  %v234 = vpop.f32.mrb[0].mxu0
  %v235 = vadd.f32 %v78, %v234
  %v236 = vpop.f32.mrb[0].mxu0
  %237 = vmatprep.mubr.bf16.mxu0 0
  %238 = vmatmul.mubr.bf16.gmra.mrb[0].mxu0 %v109
  %v239 = vpop.f32.mrb[0].mxu0
  %v240 = vadd.f32 %v78, %v239
  %v241 = vpop.f32.mrb[0].mxu0
  %v242 = vpop.f32.mrb[0].mxu0
  %v243 = vadd.f32 %v78, %v242
  %v244 = vpop.f32.mrb[0].mxu0
  %245 = vmatprep.mubr.bf16.mxu0 0
  %246 = vmatmul.mubr.bf16.gmra.mrb[0].mxu0 %v112
  %v247 = vpop.f32.mrb[0].mxu0
  %v248 = vadd.f32 %v78, %v247
  %v249 = vpop.f32.mrb[0].mxu0
  %v250 = vpop.f32.mrb[0].mxu0
  %v251 = vadd.f32 %v78, %v250
  %v252 = vpop.f32.mrb[0].mxu0
  %253 = vmatprep.mubr.bf16.mxu0 0
  %254 = vmatmul.mubr.bf16.gmra.mrb[0].mxu0 %v115
  %v255 = vpop.f32.mrb[0].mxu0
  %v256 = vadd.f32 %v78, %v255
  %v257 = vpop.f32.mrb[0].mxu0
  %v258 = vpop.f32.mrb[0].mxu0
  %v259 = vadd.f32 %v78, %v258
  %v260 = vpop.f32.mrb[0].mxu0
  %261 = vmatprep.mubr.bf16.mxu0 0
  %262 = vmatmul.mubr.bf16.gmra.mrb[0].mxu0 %v118
  %v263 = vpop.f32.mrb[0].mxu0
  %v264 = vadd.f32 %v78, %v263
  %v265 = vpop.f32.mrb[0].mxu0
  %v266 = vpop.f32.mrb[0].mxu0
  %v267 = vadd.f32 %v78, %v266
  %v268 = vpop.f32.mrb[0].mxu0
  %269 = vmatprep.mubr.bf16.mxu0 0
  %270 = vmatmul.mubr.bf16.gmra.mrb[0].mxu0 %v121
  %v271 = vpop.f32.mrb[0].mxu0
  %v272 = vadd.f32 %v78, %v271
  %v273 = vpop.f32.mrb[0].mxu0
  %v274 = vpop.f32.mrb[0].mxu0
  %v275 = vadd.f32 %v78, %v274
  %v276 = vpop.f32.mrb[0].mxu0
  %277 = vmatprep.mubr.bf16.mxu0 0
  %278 = vmatmul.mubr.bf16.gmra.mrb[0].mxu0 %v124
  %v279 = vpop.f32.mrb[0].mxu0
  %v280 = vadd.f32 %v78, %v279
  %v281 = vpop.f32.mrb[0].mxu0
  %v282 = vpop.f32.mrb[0].mxu0
  %v283 = vadd.f32 %v78, %v282
  %v284 = vpop.f32.mrb[0].mxu0
  %285 = vmatprep.mubr.bf16.mxu0 0
  %286 = vmatmul.mubr.bf16.gmra.mrb[0].mxu0 %v127
  %v287 = vpop.f32.mrb[0].mxu0
  %v288 = vadd.f32 %v78, %v287
  %v289 = vpop.f32.mrb[0].mxu0
  %v290 = vpop.f32.mrb[0].mxu0
  %v291 = vadd.f32 %v78, %v290
  %v292 = vpop.f32.mrb[0].mxu0
  %293 = vdwg.mxu0
  %v294 = vmax.f32 %v168, 0.0
  %v295 = vmax.f32 %v171, 0.0
  %v296 = vmax.f32 %v176, 0.0
  %v297 = vmax.f32 %v179, 0.0
  %v298 = vmax.f32 %v184, 0.0
  %v299 = vmax.f32 %v187, 0.0
  %v300 = vmax.f32 %v192, 0.0
  %v301 = vmax.f32 %v195, 0.0
  %v302 = vmax.f32 %v200, 0.0
  %v303 = vmax.f32 %v203, 0.0
  %v304 = vmax.f32 %v208, 0.0
  %v305 = vmax.f32 %v211, 0.0
  %v306 = vmax.f32 %v216, 0.0
  %v307 = vmax.f32 %v219, 0.0
  %v308 = vmax.f32 %v224, 0.0
  %v309 = vmax.f32 %v227, 0.0
  %v310 = vmax.f32 %v232, 0.0
  %v311 = vmax.f32 %v235, 0.0
  %v312 = vmax.f32 %v240, 0.0
  %v313 = vmax.f32 %v243, 0.0
  %v314 = vmax.f32 %v248, 0.0
  %v315 = vmax.f32 %v251, 0.0
  %v316 = vmax.f32 %v256, 0.0
  %v317 = vmax.f32 %v259, 0.0
  %v318 = vmax.f32 %v264, 0.0
  %v319 = vmax.f32 %v267, 0.0
  %v320 = vmax.f32 %v272, 0.0
  %v321 = vmax.f32 %v275, 0.0
  %v322 = vmax.f32 %v280, 0.0
  %v323 = vmax.f32 %v283, 0.0
  %v324 = vmax.f32 %v288, 0.0
  %v325 = vmax.f32 %v291, 0.0
  %v326 = vld [vmem:[%s4] sm:$0xf]
  %v327 = vld [vmem:[%s4 + $0x4] sm:$0xf]
  %v328 = vld [vmem:[%s4 + $0x8] sm:$0xf]
  %v329 = vld [vmem:[%s4 + $0xc] sm:$0xf]
  %v330 = vld [vmem:[%s4 + $0x10] sm:$0xf]
  %v331 = vld [vmem:[%s4 + $0x14] sm:$0xf]
  %v332 = vld [vmem:[%s4 + $0x18] sm:$0xf]
  %v333 = vld [vmem:[%s4 + $0x1c] sm:$0xf]
  %v334 = vld [vmem:[%s4 + $0x20] sm:$0xf]
  %v335 = vld [vmem:[%s4 + $0x24] sm:$0xf]
  %v336 = vld [vmem:[%s4 + $0x28] sm:$0xf]
  %v337 = vld [vmem:[%s4 + $0x2c] sm:$0xf]
  %v338 = vld [vmem:[%s4 + $0x30] sm:$0xf]
  %v339 = vld [vmem:[%s4 + $0x34] sm:$0xf]
  %v340 = vld [vmem:[%s4 + $0x38] sm:$0xf]
  %v341 = vld [vmem:[%s4 + $0x3c] sm:$0xf]
  %v342 = vld [vmem:[%s5] sm:$0x1]
  %v343 = vpack.c.bf16 %v295, %v294
  %v344 = vpack.c.bf16 %v297, %v296
  %v345 = vpack.c.bf16 %v299, %v298
  %v346 = vpack.c.bf16 %v301, %v300
  %v347 = vpack.c.bf16 %v303, %v302
  %v348 = vpack.c.bf16 %v305, %v304
  %v349 = vpack.c.bf16 %v307, %v306
  %v350 = vpack.c.bf16 %v309, %v308
  %v351 = vpack.c.bf16 %v311, %v310
  %v352 = vpack.c.bf16 %v313, %v312
  %v353 = vpack.c.bf16 %v315, %v314
  %v354 = vpack.c.bf16 %v317, %v316
  %v355 = vpack.c.bf16 %v319, %v318
  %v356 = vpack.c.bf16 %v321, %v320
  %v357 = vpack.c.bf16 %v323, %v322
  %v358 = vpack.c.bf16 %v325, %v324
  %v360 = vlaneseq
  %v361 = vshrl.u32 %v360, 7
  %v362 = vsub.s32 0, %v361
  %v363 = vrot.slane %v342, %v362
  %v381 = vunpack.c.l.b16 %v326
  %v382 = vunpack.c.l.b16 %v327
  %v383 = vunpack.c.l.b16 %v328
  %v384 = vunpack.c.l.b16 %v329
  %v385 = vunpack.c.l.b16 %v330
  %v386 = vunpack.c.l.b16 %v331
  %v387 = vunpack.c.l.b16 %v332
  %v388 = vunpack.c.l.b16 %v333
  %v389 = vunpack.c.l.b16 %v334
  %v390 = vunpack.c.l.b16 %v335
  %v391 = vunpack.c.l.b16 %v336
  %v392 = vunpack.c.l.b16 %v337
  %v393 = vunpack.c.l.b16 %v338
  %v394 = vunpack.c.l.b16 %v339
  %v395 = vunpack.c.l.b16 %v340
  %v396 = vunpack.c.l.b16 %v341
  %v397 = vpack.c.b16 %v382, %v381
  %v398 = vpack.c.b16 %v384, %v383
  %v399 = vpack.c.b16 %v386, %v385
  %v400 = vpack.c.b16 %v388, %v387
  %v401 = vpack.c.b16 %v390, %v389
  %v402 = vpack.c.b16 %v392, %v391
  %v403 = vpack.c.b16 %v394, %v393
  %v404 = vpack.c.b16 %v396, %v395
  %413 = vmatprep.subr.bf16.mxu0 0
  %414 = vmatpush1.bf16.msra.mxu0 %v397
  %415 = vmatprep.subr.bf16.mxu0 0
  %416 = vmatpush1.bf16.msra.mxu0 %v398
  %417 = vmatprep.subr.bf16.mxu0 0
  %418 = vmatpush1.bf16.msra.mxu0 %v399
  %419 = vmatprep.subr.bf16.mxu0 0
  %420 = vmatpush1.bf16.msra.mxu0 %v400
  %421 = vmatprep.subr.bf16.mxu0 0
  %422 = vmatpush1.bf16.msra.mxu0 %v401
  %423 = vmatprep.subr.bf16.mxu0 0
  %424 = vmatpush1.bf16.msra.mxu0 %v402
  %425 = vmatprep.subr.bf16.mxu0 0
  %426 = vmatpush1.bf16.msra.mxu0 %v403
  %427 = vmatprep.subr.bf16.mxu0 0
  %428 = vmatpush1.bf16.msra.mxu0 %v404
  %429 = vmatprep.subr.bf16.mxu0 0
  %430 = vmatpush1.bf16.msra.mxu0 0
  %431 = vmatprep.subr.bf16.mxu0 0
  %432 = vmatpush1.bf16.msra.mxu0 0
  %433 = vmatprep.subr.bf16.mxu0 0
  %434 = vmatpush1.bf16.msra.mxu0 0
  %435 = vmatprep.subr.bf16.mxu0 0
  %436 = vmatpush1.bf16.msra.mxu0 0
  %437 = vmatprep.subr.bf16.mxu0 0
  %438 = vmatpush1.bf16.msra.mxu0 0
  %439 = vmatprep.subr.bf16.mxu0 0
  %440 = vmatpush1.bf16.msra.mxu0 0
  %441 = vmatprep.subr.bf16.mxu0 0
  %442 = vmatpush1.bf16.msra.mxu0 0
  %443 = vmatprep.subr.bf16.mxu0 0
  %444 = vmatpush1.bf16.msra.mxu0 0
  %445 = vmatprep.mubr.bf16.mxu0 0
  %446 = vmatmul.mubr.bf16.gmra.mrb[0].mxu0 %v343
  %v447 = vpop.f32.mrb[0].mxu0
  %v448 = vadd.f32 %v363, %v447
  %v449 = vpop.f32.mrb[0].mxu0
  %v450 = vpop.f32.mrb[0].mxu0
  %v451 = vadd.f32 %v363, %v450
  %v452 = vpop.f32.mrb[0].mxu0
  %453 = vmatprep.mubr.bf16.mxu0 0
  %454 = vmatmul.mubr.bf16.gmra.mrb[0].mxu0 %v344
  %v455 = vpop.f32.mrb[0].mxu0
  %v456 = vadd.f32 %v363, %v455
  %v457 = vpop.f32.mrb[0].mxu0
  %v458 = vpop.f32.mrb[0].mxu0
  %v459 = vadd.f32 %v363, %v458
  %v460 = vpop.f32.mrb[0].mxu0
  %461 = vmatprep.mubr.bf16.mxu0 0
  %462 = vmatmul.mubr.bf16.gmra.mrb[0].mxu0 %v345
  %v463 = vpop.f32.mrb[0].mxu0
  %v464 = vadd.f32 %v363, %v463
  %v465 = vpop.f32.mrb[0].mxu0
  %v466 = vpop.f32.mrb[0].mxu0
  %v467 = vadd.f32 %v363, %v466
  %v468 = vpop.f32.mrb[0].mxu0
  %469 = vmatprep.mubr.bf16.mxu0 0
  %470 = vmatmul.mubr.bf16.gmra.mrb[0].mxu0 %v346
  %v471 = vpop.f32.mrb[0].mxu0
  %v472 = vadd.f32 %v363, %v471
  %v473 = vpop.f32.mrb[0].mxu0
  %v474 = vpop.f32.mrb[0].mxu0
  %v475 = vadd.f32 %v363, %v474
  %v476 = vpop.f32.mrb[0].mxu0
  %477 = vmatprep.mubr.bf16.mxu0 0
  %478 = vmatmul.mubr.bf16.gmra.mrb[0].mxu0 %v347
  %v479 = vpop.f32.mrb[0].mxu0
  %v480 = vadd.f32 %v363, %v479
  %v481 = vpop.f32.mrb[0].mxu0
  %v482 = vpop.f32.mrb[0].mxu0
  %v483 = vadd.f32 %v363, %v482
  %v484 = vpop.f32.mrb[0].mxu0
  %485 = vmatprep.mubr.bf16.mxu0 0
  %486 = vmatmul.mubr.bf16.gmra.mrb[0].mxu0 %v348
  %v487 = vpop.f32.mrb[0].mxu0
  %v488 = vadd.f32 %v363, %v487
  %v489 = vpop.f32.mrb[0].mxu0
  %v490 = vpop.f32.mrb[0].mxu0
  %v491 = vadd.f32 %v363, %v490
  %v492 = vpop.f32.mrb[0].mxu0
  %493 = vmatprep.mubr.bf16.mxu0 0
  %494 = vmatmul.mubr.bf16.gmra.mrb[0].mxu0 %v349
  %v495 = vpop.f32.mrb[0].mxu0
  %v496 = vadd.f32 %v363, %v495
  %v497 = vpop.f32.mrb[0].mxu0
  %v498 = vpop.f32.mrb[0].mxu0
  %v499 = vadd.f32 %v363, %v498
  %v500 = vpop.f32.mrb[0].mxu0
  %501 = vmatprep.mubr.bf16.mxu0 0
  %502 = vmatmul.mubr.bf16.gmra.mrb[0].mxu0 %v350
  %v503 = vpop.f32.mrb[0].mxu0
  %v504 = vadd.f32 %v363, %v503
  %v505 = vpop.f32.mrb[0].mxu0
  %v506 = vpop.f32.mrb[0].mxu0
  %v507 = vadd.f32 %v363, %v506
  %v508 = vpop.f32.mrb[0].mxu0
  %509 = vmatprep.mubr.bf16.mxu0 0
  %510 = vmatmul.mubr.bf16.gmra.mrb[0].mxu0 %v351
  %v511 = vpop.f32.mrb[0].mxu0
  %v512 = vadd.f32 %v363, %v511
  %v513 = vpop.f32.mrb[0].mxu0
  %v514 = vpop.f32.mrb[0].mxu0
  %v515 = vadd.f32 %v363, %v514
  %v516 = vpop.f32.mrb[0].mxu0
  %517 = vmatprep.mubr.bf16.mxu0 0
  %518 = vmatmul.mubr.bf16.gmra.mrb[0].mxu0 %v352
  %v519 = vpop.f32.mrb[0].mxu0
  %v520 = vadd.f32 %v363, %v519
  %v521 = vpop.f32.mrb[0].mxu0
  %v522 = vpop.f32.mrb[0].mxu0
  %v523 = vadd.f32 %v363, %v522
  %v524 = vpop.f32.mrb[0].mxu0
  %525 = vmatprep.mubr.bf16.mxu0 0
  %526 = vmatmul.mubr.bf16.gmra.mrb[0].mxu0 %v353
  %v527 = vpop.f32.mrb[0].mxu0
  %v528 = vadd.f32 %v363, %v527
  %v529 = vpop.f32.mrb[0].mxu0
  %v530 = vpop.f32.mrb[0].mxu0
  %v531 = vadd.f32 %v363, %v530
  %v532 = vpop.f32.mrb[0].mxu0
  %533 = vmatprep.mubr.bf16.mxu0 0
  %534 = vmatmul.mubr.bf16.gmra.mrb[0].mxu0 %v354
  %v535 = vpop.f32.mrb[0].mxu0
  %v536 = vadd.f32 %v363, %v535
  %v537 = vpop.f32.mrb[0].mxu0
  %v538 = vpop.f32.mrb[0].mxu0
  %v539 = vadd.f32 %v363, %v538
  %v540 = vpop.f32.mrb[0].mxu0
  %541 = vmatprep.mubr.bf16.mxu0 0
  %542 = vmatmul.mubr.bf16.gmra.mrb[0].mxu0 %v355
  %v543 = vpop.f32.mrb[0].mxu0
  %v544 = vadd.f32 %v363, %v543
  %v545 = vpop.f32.mrb[0].mxu0
  %v546 = vpop.f32.mrb[0].mxu0
  %v547 = vadd.f32 %v363, %v546
  %v548 = vpop.f32.mrb[0].mxu0
  %549 = vmatprep.mubr.bf16.mxu0 0
  %550 = vmatmul.mubr.bf16.gmra.mrb[0].mxu0 %v356
  %v551 = vpop.f32.mrb[0].mxu0
  %v552 = vadd.f32 %v363, %v551
  %v553 = vpop.f32.mrb[0].mxu0
  %v554 = vpop.f32.mrb[0].mxu0
  %v555 = vadd.f32 %v363, %v554
  %v556 = vpop.f32.mrb[0].mxu0
  %557 = vmatprep.mubr.bf16.mxu0 0
  %558 = vmatmul.mubr.bf16.gmra.mrb[0].mxu0 %v357
  %v559 = vpop.f32.mrb[0].mxu0
  %v560 = vadd.f32 %v363, %v559
  %v561 = vpop.f32.mrb[0].mxu0
  %v562 = vpop.f32.mrb[0].mxu0
  %v563 = vadd.f32 %v363, %v562
  %v564 = vpop.f32.mrb[0].mxu0
  %565 = vmatprep.mubr.bf16.mxu0 0
  %566 = vmatmul.mubr.bf16.gmra.mrb[0].mxu0 %v358
  %v567 = vpop.f32.mrb[0].mxu0
  %v568 = vadd.f32 %v363, %v567
  %v569 = vpop.f32.mrb[0].mxu0
  %v570 = vpop.f32.mrb[0].mxu0
  %v571 = vadd.f32 %v363, %v570
  %v572 = vpop.f32.mrb[0].mxu0
  %573 = vdwg.mxu0
  %v574 = vld [vmem:[%s0] sm:$0xf]
  %v575 = vpack.c.bf16 %v451, %v448
  %v576 = vpack.c.bf16 %v459, %v456
  %v577 = vpack.c.bf16 %v467, %v464
  %v578 = vpack.c.bf16 %v475, %v472
  %v579 = vpack.c.bf16 %v483, %v480
  %v580 = vpack.c.bf16 %v491, %v488
  %v581 = vpack.c.bf16 %v499, %v496
  %v582 = vpack.c.bf16 %v507, %v504
  %v583 = vpack.c.bf16 %v515, %v512
  %v584 = vpack.c.bf16 %v523, %v520
  %v585 = vpack.c.bf16 %v531, %v528
  %v586 = vpack.c.bf16 %v539, %v536
  %v587 = vpack.c.bf16 %v547, %v544
  %v588 = vpack.c.bf16 %v555, %v552
  %v589 = vpack.c.bf16 %v563, %v560
  %v590 = vpack.c.bf16 %v571, %v568
  %591 = vmatprep.subr.bf16.mxu0 0
  %592 = vmatpush1.bf16.xpose.msra.mxu0 %v575
  %593 = vmatprep.subr.bf16.mxu0 0
  %594 = vmatpush1.bf16.xpose.msra.mxu0 %v576
  %595 = vmatprep.subr.bf16.mxu0 0
  %596 = vmatpush1.bf16.xpose.msra.mxu0 %v577
  %597 = vmatprep.subr.bf16.mxu0 0
  %598 = vmatpush1.bf16.xpose.msra.mxu0 %v578
  %599 = vmatprep.subr.bf16.mxu0 0
  %600 = vmatpush1.bf16.xpose.msra.mxu0 %v579
  %601 = vmatprep.subr.bf16.mxu0 0
  %602 = vmatpush1.bf16.xpose.msra.mxu0 %v580
  %603 = vmatprep.subr.bf16.mxu0 0
  %604 = vmatpush1.bf16.xpose.msra.mxu0 %v581
  %605 = vmatprep.subr.bf16.mxu0 0
  %606 = vmatpush1.bf16.xpose.msra.mxu0 %v582
  %607 = vmatprep.subr.bf16.mxu0 0
  %608 = vmatpush1.bf16.xpose.msra.mxu0 %v583
  %609 = vmatprep.subr.bf16.mxu0 0
  %610 = vmatpush1.bf16.xpose.msra.mxu0 %v584
  %611 = vmatprep.subr.bf16.mxu0 0
  %612 = vmatpush1.bf16.xpose.msra.mxu0 %v585
  %613 = vmatprep.subr.bf16.mxu0 0
  %614 = vmatpush1.bf16.xpose.msra.mxu0 %v586
  %615 = vmatprep.subr.bf16.mxu0 0
  %616 = vmatpush1.bf16.xpose.msra.mxu0 %v587
  %617 = vmatprep.subr.bf16.mxu0 0
  %618 = vmatpush1.bf16.xpose.msra.mxu0 %v588
  %619 = vmatprep.subr.bf16.mxu0 0
  %620 = vmatpush1.bf16.xpose.msra.mxu0 %v589
  %621 = vmatprep.subr.bf16.mxu0 0
  %622 = vmatpush1.bf16.xpose.msra.mxu0 %v590
  %623 = vmatprep.mubr.bf16.mxu0 0
  %624 = vmatmul.mubr.bf16.gmra.mrb[0].mxu0 %v574
  %v625 = vpop.f32.mrb[0].mxu0
  %v626 = vadd.f32 0.0, %v625
  %v627 = vpop.f32.mrb[0].mxu0
  %v628 = vadd.f32 0.0, %v627
  %v629 = vpop.f32.mrb[0].mxu0
  %v630 = vpop.f32.mrb[0].mxu0
  %631 = vdwg.mxu0
  %632 = vst [vmem:[%s6] sm:$0xff] %v626
  %633 = vst [vmem:[%s6 + $0x8] sm:$0xff] %v628
  // Predicated region
  $region26: #{deeponet_cp_forward.3} parent=0 // pred_check
    _
  $region27: #{deeponet_cp_forward.3} parent=0 // pred_check_branch
    %635 = sbr.rel (0) target = $region29
  $region28: #{deeponet_cp_forward.3} parent=0 // pred_region
    _
  $region29: #{deeponet_cp_forward.3} parent=0 // pred_fallthru
    _
  // Predicated region
  $region30: #{deeponet_cp_forward.3} parent=0 // pred_check
    _
  $region31: #{deeponet_cp_forward.3} parent=0 // pred_check_branch
    %637 = sbr.rel (0) target = $region33
  $region32: #{deeponet_cp_forward.3} parent=0 // pred_region
    _
  $region33: #{deeponet_cp_forward.3} parent=0 // pred_fallthru
    _

</llo_original>
